<compile_context>
chip_gen: v7x
topology: tpu7x:2x2x1
jax: 0.10.0
libtpu: 0.0.40
codegen_flags: <defaults>
</compile_context>

<pallas_src>
import functools

import jax
import jax.numpy as jnp
from jax.experimental import pallas as pl
from jax.experimental.pallas import tpu as pltpu

# Module hyper-parameters (match the PyTorch defaults).
P = 1
SMOOTH = 1.0
IGNORE_LB = 255
REDUCTION = "mean"

_PAD_LOGIT = -1.0e4          # sigmoid(-1e4) == 0 exactly in f32


def _cdiv(a, b):
    return (a + b - 1) // b


def _vmem_limit_bytes():
    cap = 64 * 1024 * 1024                        # conservative fallback (v7x-sized)
    try:
        info = pltpu.get_tpu_info()
        cap = int(getattr(info, "vmem_capacity_bytes", cap))
    except Exception:
        pass
    # 3/4 of physical, capped at 96 MiB: ~96 MiB on v5e/v6e (128 MiB VMEM),
    # ~48 MiB on v7x (64 MiB VMEM) -> headroom for Mosaic internal scratch.
    return min((cap * 3) // 4, 96 * 1024 * 1024)


def _choose_tile_cols(C, logits_itemsize, label_itemsize, vmem_limit):
    """Tile width in 128-column units, sized from the per-chip VMEM budget."""
    # Per 128 columns of tile: double-buffered logits+label pipeline buffers
    # plus ~4 block-sized f32 temporaries (f32 upcast / probs / select
    # results) that Mosaic materializes for the elementwise chain.
    per_unit = 128 * (2 * (C * logits_itemsize + label_itemsize) + 4 * C * 4)
    budget = (vmem_limit * 7) // 10
    return max(1, budget // per_unit)


def _make_dice_kernel(*, p, ignore_lb, has_weight, num_classes, t_hw, hw, npt,
                      needs_mask):
    # ignore_lb == 255 never collides with a class row for real class counts,
    # so (c_iota == lbl) alone zeroes ignored pixels; keep the general path
    # in case ignore_lb is a valid class index.
    explicit_ignore = 0 <= ignore_lb < num_classes

    def accumulate(masked, g, logits_ref, label_ref, numer_acc, denom_acc):
        x = logits_ref[...].astype(jnp.float32)                  # (C, T)
        lbl = label_ref[...].astype(jnp.int32)                   # (1, T)
        if masked:
            col = g * t_hw + jax.lax.broadcasted_iota(jnp.int32, (1, t_hw), 1)
            col_ok = col < hw                                    # (1, T)
            x = jnp.where(col_ok, x, _PAD_LOGIT)                 # probs -> 0
            lbl = jnp.where(col_ok, lbl, ignore_lb)              # one-hot -> 0
        probs = jax.nn.sigmoid(x)
        c_iota = jax.lax.broadcasted_iota(jnp.int32, probs.shape, 0)
        onehot = c_iota == lbl                                   # bool (C, T)
        if explicit_ignore:
            onehot = jnp.logical_and(onehot, lbl != ignore_lb)
        numer_acc[...] += jnp.sum(jnp.where(onehot, probs, 0.0),
                                  axis=-1, keepdims=True)
        pp = probs if p == 1 else probs ** p                     # one_hot**p == one_hot
        denom_acc[...] += jnp.sum(jnp.where(onehot, pp + 1.0, pp),
                                  axis=-1, keepdims=True)

    def kernel(*refs):
        if has_weight:
            logits_ref, label_ref, w_ref, out_ref, numer_acc, denom_acc = refs
        else:
            logits_ref, label_ref, out_ref, numer_acc, denom_acc = refs
            w_ref = None

        s = pl.program_id(1)
        t = pl.program_id(2)

        @pl.when(t == 0)
        def _init():
            numer_acc[...] = jnp.zeros_like(numer_acc)
            denom_acc[...] = jnp.zeros_like(denom_acc)

        g = s * npt + t                                          # global tile index

        if needs_mask:
            is_edge = (g + 1) * t_hw > hw

            @pl.when(jnp.logical_not(is_edge))
            def _full():
                accumulate(False, g, logits_ref, label_ref, numer_acc, denom_acc)

            @pl.when(is_edge)
            def _edge():
                accumulate(True, g, logits_ref, label_ref, numer_acc, denom_acc)
        else:
            accumulate(False, g, logits_ref, label_ref, numer_acc, denom_acc)

        @pl.when(t == npt - 1)
        def _finalize():
            numer = numer_acc[...]                               # (C, 1)
            denom = denom_acc[...]
            if has_weight:
                w = w_ref[...]                                   # (C, 1)
                numer = numer * w
                denom = denom * w
            ns = jnp.sum(numer, axis=0, keepdims=True)           # (1, 1)
            ds = jnp.sum(denom, axis=0, keepdims=True)
            out_ref[0:1, :] = jnp.broadcast_to(ns, (1, 128))
            out_ref[1:2, :] = jnp.broadcast_to(ds, (1, 128))

    return kernel


@functools.partial(jax.jit, static_argnames=("max_tile_cols",))
def _dice_loss_impl(logits, label, weight, max_tile_cols=None):
    N, C, H, W = logits.shape
    HW = H * W

    logits_f = logits.reshape(N, C, HW)         # keep dtype (bf16 halves traffic)
    label_f = label.reshape(N, 1, HW)           # keep dtype (uint8 = 4x less traffic)

    vmem_limit = _vmem_limit_bytes()
    u = _choose_tile_cols(C, logits_f.dtype.itemsize, label_f.dtype.itemsize,
                          vmem_limit)
    if max_tile_cols is not None:               # test hook / manual override
        u = min(u, max(1, max_tile_cols // 128))

    t_cols = _cdiv(HW, 128)                     # spatial extent in 128-col units
    num_shards = 2 if t_cols >= 2 else 1        # feed both v7x cores even at N=1
    total_tiles = num_shards * _cdiv(_cdiv(t_cols, u), num_shards)
    u = _cdiv(t_cols, total_tiles)              # re-balance: waste < 128 cols/tile
    t_hw = u * 128
    npt = total_tiles // num_shards             # tiles per shard
    last_real_block = _cdiv(t_cols, u) - 1      # last block holding real data
    needs_mask = (total_tiles * t_hw != HW)

    if total_tiles - 1 > last_real_block:
        # Dead tiles exist (only on the last shard): clamp their HBM block
        # index; their contribution is masked to zero in-kernel.
        def blk(n, s, t):
            return jnp.minimum(s * npt + t, last_real_block)
    else:
        def blk(n, s, t):
            return s * npt + t

    has_weight = weight is not None
    in_specs = [
        pl.BlockSpec((None, C, t_hw), lambda n, s, t: (n, 0, blk(n, s, t))),
        pl.BlockSpec((None, 1, t_hw), lambda n, s, t: (n, 0, blk(n, s, t))),
    ]
    inputs = [logits_f, label_f]
    if has_weight:
        in_specs.append(pl.BlockSpec((C, 1), lambda n, s, t: (0, 0)))
        inputs.append(jnp.asarray(weight, jnp.float32).reshape(C, 1))

    kernel = _make_dice_kernel(
        p=P, ignore_lb=IGNORE_LB, has_weight=has_weight, num_classes=C,
        t_hw=t_hw, hw=HW, npt=npt, needs_mask=needs_mask)

    cost = pl.CostEstimate(
        flops=int(10 * N * C * HW),
        transcendentals=int(N * C * HW),
        bytes_accessed=int(logits_f.size * logits_f.dtype.itemsize
                           + label_f.size * label_f.dtype.itemsize
                           + N * num_shards * 2 * 128 * 4),
    )

    partials = pl.pallas_call(
        kernel,
        out_shape=jax.ShapeDtypeStruct((N, num_shards, 2, 128), jnp.float32),
        grid_spec=pltpu.PrefetchScalarGridSpec(
            num_scalar_prefetch=0,
            grid=(N, num_shards, npt),
            in_specs=in_specs,
            out_specs=pl.BlockSpec((None, None, 2, 128),
                                   lambda n, s, t: (n, s, 0, 0)),
            scratch_shapes=[pltpu.VMEM((C, 1), jnp.float32),
                            pltpu.VMEM((C, 1), jnp.float32)],
        ),
        compiler_params=pltpu.CompilerParams(
            dimension_semantics=("parallel", "parallel", "arbitrary"),
            vmem_limit_bytes=vmem_limit,
        ),
        cost_estimate=cost,
    )(*inputs)

    numer = jnp.sum(partials[:, :, 0, 0], axis=1)                # (N,)
    denom = jnp.sum(partials[:, :, 1, 0], axis=1)
    loss = 1.0 - (2.0 * numer + SMOOTH) / (denom + SMOOTH)
    if REDUCTION == "mean":
        return jnp.mean(loss)
    return loss


def generalized_soft_dice_loss(logits, label, weight=None, *, max_tile_cols=None):
    return _dice_loss_impl(logits, label, weight, max_tile_cols=max_tile_cols)


def _reference(logits, label, weight):
    # Pure-JAX reference mirroring the PyTorch forward.
    logits = logits.astype(jnp.float32)
    N, C, H, W = logits.shape
    lbl_i32 = label.astype(jnp.int32)
    valid = lbl_i32 != IGNORE_LB
    lbl = jnp.where(valid, lbl_i32, 0)
    one_hot = jax.nn.one_hot(lbl, C, axis=1, dtype=jnp.float32)
    one_hot = one_hot * valid[:, None, :, :].astype(jnp.float32)
    probs = jax.nn.sigmoid(logits)
    numer = jnp.sum(probs * one_hot, axis=(2, 3))
    denom = jnp.sum(probs ** P + one_hot ** P, axis=(2, 3))
    if weight is not None:
        w = jnp.asarray(weight, jnp.float32).reshape(1, -1)
        numer = numer * w
        denom = denom * w
    numer = jnp.sum(numer, axis=1)
    denom = jnp.sum(denom, axis=1)
    loss = 1.0 - (2.0 * numer + SMOOTH) / (denom + SMOOTH)
    if REDUCTION == "mean":
        return jnp.mean(loss)
    return loss


if __name__ == "__main__":
    key = jax.random.PRNGKey(0)
    k1, k2, k3, k4, k5, k6, k7 = jax.random.split(key, 7)

    # --- Test 1: module defaults (weight=None), bf16 logits, int32 labels,
    #             exact 128-multiple spatial size (no masking path). ---------
    N, C, H, W = 2, 4, 16, 16
    logits = jax.random.normal(k1, (N, C, H, W), jnp.float32).astype(jnp.bfloat16)
    label = jax.random.randint(k2, (N, H, W), 0, C, dtype=jnp.int32)
    label = jnp.where(jax.random.bernoulli(k3, 0.1, (N, H, W)),
                      jnp.int32(IGNORE_LB), label)
    loss = generalized_soft_dice_loss(logits, label)
    jax.block_until_ready(loss)
    ref = _reference(logits, label, None)
    assert jnp.allclose(loss, ref, atol=1e-4, rtol=1e-4), (loss, ref)

    # --- Test 2: f32 logits, uint8 labels (narrow label path), per-class
    #             weight, ragged spatial size (in-kernel tail masking). ------
    N2, C2, H2, W2 = 2, 3, 7, 9
    logits2 = jax.random.normal(k4, (N2, C2, H2, W2), jnp.float32)
    label2 = jax.random.randint(k5, (N2, H2, W2), 0, C2, dtype=jnp.int32)
    label2 = jnp.where(jax.random.bernoulli(k6, 0.15, (N2, H2, W2)),
                       jnp.int32(IGNORE_LB), label2).astype(jnp.uint8)
    weight2 = jnp.array([0.5, 1.0, 2.0], jnp.float32)
    loss2 = generalized_soft_dice_loss(logits2, label2, weight2)
    jax.block_until_ready(loss2)
    ref2 = _reference(logits2, label2, weight2)
    assert jnp.allclose(loss2, ref2, atol=1e-4, rtol=1e-4), (loss2, ref2)

    # --- Test 3: N=1 (spatial split feeds both cores), multi-tile shards,
    #             odd real-tile count -> dead-tile clamping + masking. -------
    N3, C3, H3, W3 = 1, 4, 20, 32
    logits3 = jax.random.normal(k7, (N3, C3, H3, W3), jnp.float32).astype(jnp.bfloat16)
    label3 = jax.random.randint(k2, (N3, H3, W3), 0, C3, dtype=jnp.int32)
    label3 = jnp.where(jax.random.bernoulli(k3, 0.05, (N3, H3, W3)),
                       jnp.int32(IGNORE_LB), label3)
    loss3 = generalized_soft_dice_loss(logits3, label3, max_tile_cols=128)
    jax.block_until_ready(loss3)
    ref3 = _reference(logits3, label3, None)
    assert jnp.allclose(loss3, ref3, atol=1e-4, rtol=1e-4), (loss3, ref3)

    print("KERNEL_OK")
</pallas_src>

<mosaic_0001>
module attributes {stable_mosaic.version = 11 : i64} {
  func.func @kernel(%arg0: i32, %arg1: i32, %arg2: i32, %arg3: memref<1x4x128xbf16, #tpu.memory_space<vmem>>, %arg4: memref<1x1x128xi32, #tpu.memory_space<vmem>>, %arg5: memref<1x1x2x128xf32, #tpu.memory_space<vmem>>, %arg6: memref<4x1xf32, #tpu.memory_space<vmem>>, %arg7: memref<4x1xf32, #tpu.memory_space<vmem>>) attributes {dimension_semantics = [#tpu.dimension_semantics<parallel>, #tpu.dimension_semantics<parallel>, #tpu.dimension_semantics<arbitrary>], iteration_bounds = array<i64: 2, 2, 1>, scalar_prefetch = 0 : i64, scratch_operands = 2 : i64, tpu.core_type = #tpu.core_type<tc>, window_params = [{transform_indices = @transform_0, window_bounds = array<i64: 1, 4, 128>}, {transform_indices = @transform_1, window_bounds = array<i64: 1, 1, 128>}, {transform_indices = @transform_2, window_bounds = array<i64: 1, 1, 2, 128>}]} {
    %c0_i32 = arith.constant 0 : i32
    %0 = arith.cmpi eq, %arg2, %c0_i32 : i32
    %1 = arith.extui %0 : i1 to i32
    %c0_i32_0 = arith.constant 0 : i32
    %2 = arith.cmpi ne, %1, %c0_i32_0 : i32
    scf.if %2 {
      %cst_20 = arith.constant 0.000000e+00 : f32
      %34 = vector.broadcast %cst_20 : f32 to vector<4x1xf32>
      %c0_21 = arith.constant 0 : index
      %c0_22 = arith.constant 0 : index
      %35 = vector.load %arg6[%c0_21, %c0_22] : memref<4x1xf32, #tpu.memory_space<vmem>>, vector<4x1xf32>
      tpu.vector_store %arg6[%c0_21, %c0_22], %34 {strides = array<i32>} : memref<4x1xf32, #tpu.memory_space<vmem>>, vector<4x1xf32>,
      %cst_23 = arith.constant 0.000000e+00 : f32
      %36 = vector.broadcast %cst_23 : f32 to vector<4x1xf32>
      %c0_24 = arith.constant 0 : index
      %c0_25 = arith.constant 0 : index
      %37 = vector.load %arg7[%c0_24, %c0_25] : memref<4x1xf32, #tpu.memory_space<vmem>>, vector<4x1xf32>
      tpu.vector_store %arg7[%c0_24, %c0_25], %36 {strides = array<i32>} : memref<4x1xf32, #tpu.memory_space<vmem>>, vector<4x1xf32>,
    } else {
    }
    %c0 = arith.constant 0 : index
    %c0_1 = arith.constant 0 : index
    %c0_2 = arith.constant 0 : index
    %3 = vector.load %arg3[%c0, %c0_1, %c0_2] : memref<1x4x128xbf16, #tpu.memory_space<vmem>>, vector<1x4x128xbf16>
    %4 = vector.shape_cast %3 : vector<1x4x128xbf16> to vector<4x128xbf16>
    %5 = arith.extf %4 : vector<4x128xbf16> to vector<4x128xf32>
    %c0_3 = arith.constant 0 : index
    %c0_4 = arith.constant 0 : index
    %c0_5 = arith.constant 0 : index
    %6 = vector.load %arg4[%c0_3, %c0_4, %c0_5] : memref<1x1x128xi32, #tpu.memory_space<vmem>>, vector<1x1x128xi32>
    %7 = vector.shape_cast %6 : vector<1x1x128xi32> to vector<1x128xi32>
    %8 = arith.negf %5 : vector<4x128xf32>
    %9 = math.exp %8 : vector<4x128xf32>
    %cst = arith.constant 1.000000e+00 : f32
    %10 = vector.broadcast %cst : f32 to vector<4x128xf32>
    %11 = arith.addf %10, %9 : vector<4x128xf32>
    %12 = arith.divf %10, %11 : vector<4x128xf32>
    %13 = tpu.iota {dimensions = array<i32: 0>} : vector<4x128xi32>
    %14 = vector.broadcast %7 : vector<1x128xi32> to vector<4x128xi32>
    %15 = arith.cmpi eq, %13, %14 : vector<4x128xi32>
    %c0_6 = arith.constant 0 : index
    %c0_7 = arith.constant 0 : index
    %16 = vector.load %arg6[%c0_6, %c0_7] : memref<4x1xf32, #tpu.memory_space<vmem>>, vector<4x1xf32>
    %cst_8 = arith.constant 0.000000e+00 : f32
    %17 = vector.broadcast %cst_8 : f32 to vector<4x128xf32>
    %18 = arith.select %15, %12, %17 : vector<4x128xi1>, vector<4x128xf32>
    %cst_9 = arith.constant dense<0.000000e+00> : vector<4xf32>
    %19 = vector.multi_reduction <add>, %18, %cst_9 [1] : vector<4x128xf32> to vector<4xf32>
    %20 = vector.shape_cast %19 : vector<4xf32> to vector<4x1xf32>
    %21 = arith.addf %16, %20 : vector<4x1xf32>
    %c0_10 = arith.constant 0 : index
    %c0_11 = arith.constant 0 : index
    %22 = vector.load %arg6[%c0_10, %c0_11] : memref<4x1xf32, #tpu.memory_space<vmem>>, vector<4x1xf32>
    tpu.vector_store %arg6[%c0_10, %c0_11], %21 {strides = array<i32>} : memref<4x1xf32, #tpu.memory_space<vmem>>, vector<4x1xf32>,
    %c0_12 = arith.constant 0 : index
    %c0_13 = arith.constant 0 : index
    %23 = vector.load %arg7[%c0_12, %c0_13] : memref<4x1xf32, #tpu.memory_space<vmem>>, vector<4x1xf32>
    %cst_14 = arith.constant 1.000000e+00 : f32
    %24 = vector.broadcast %cst_14 : f32 to vector<4x128xf32>
    %25 = arith.addf %12, %24 : vector<4x128xf32>
    %26 = arith.select %15, %25, %12 : vector<4x128xi1>, vector<4x128xf32>
    %cst_15 = arith.constant dense<0.000000e+00> : vector<4xf32>
    %27 = vector.multi_reduction <add>, %26, %cst_15 [1] : vector<4x128xf32> to vector<4xf32>
    %28 = vector.shape_cast %27 : vector<4xf32> to vector<4x1xf32>
    %29 = arith.addf %23, %28 : vector<4x1xf32>
    %c0_16 = arith.constant 0 : index
    %c0_17 = arith.constant 0 : index
    %30 = vector.load %arg7[%c0_16, %c0_17] : memref<4x1xf32, #tpu.memory_space<vmem>>, vector<4x1xf32>
    tpu.vector_store %arg7[%c0_16, %c0_17], %29 {strides = array<i32>} : memref<4x1xf32, #tpu.memory_space<vmem>>, vector<4x1xf32>,
    %c0_i32_18 = arith.constant 0 : i32
    %31 = arith.cmpi eq, %arg2, %c0_i32_18 : i32
    %32 = arith.extui %31 : i1 to i32
    %c0_i32_19 = arith.constant 0 : i32
    %33 = arith.cmpi ne, %32, %c0_i32_19 : i32
    scf.if %33 {
      %c0_20 = arith.constant 0 : index
      %c0_21 = arith.constant 0 : index
      %34 = vector.load %arg6[%c0_20, %c0_21] : memref<4x1xf32, #tpu.memory_space<vmem>>, vector<4x1xf32>
      %c0_22 = arith.constant 0 : index
      %c0_23 = arith.constant 0 : index
      %35 = vector.load %arg7[%c0_22, %c0_23] : memref<4x1xf32, #tpu.memory_space<vmem>>, vector<4x1xf32>
      %cst_24 = arith.constant dense<0.000000e+00> : vector<1xf32>
      %36 = vector.multi_reduction <add>, %34, %cst_24 [0] : vector<4x1xf32> to vector<1xf32>
      %37 = vector.shape_cast %36 : vector<1xf32> to vector<1x1xf32>
      %cst_25 = arith.constant dense<0.000000e+00> : vector<1xf32>
      %38 = vector.multi_reduction <add>, %35, %cst_25 [0] : vector<4x1xf32> to vector<1xf32>
      %39 = vector.shape_cast %38 : vector<1xf32> to vector<1x1xf32>
      %40 = vector.shape_cast %37 : vector<1x1xf32> to vector<1x1xf32>
      %41 = vector.broadcast %40 : vector<1x1xf32> to vector<1x128xf32>
      %c0_26 = arith.constant 0 : index
      %c0_27 = arith.constant 0 : index
      %c0_28 = arith.constant 0 : index
      %c0_29 = arith.constant 0 : index
      %42 = vector.load %arg5[%c0_26, %c0_27, %c0_28, %c0_29] : memref<1x1x2x128xf32, #tpu.memory_space<vmem>>, vector<1x1x1x128xf32>
      %43 = vector.shape_cast %42 : vector<1x1x1x128xf32> to vector<1x128xf32>
      %44 = vector.shape_cast %41 : vector<1x128xf32> to vector<1x1x1x128xf32>
      tpu.vector_store %arg5[%c0_26, %c0_27, %c0_28, %c0_29], %44 {strides = array<i32>} : memref<1x1x2x128xf32, #tpu.memory_space<vmem>>, vector<1x1x1x128xf32>,
      %45 = vector.shape_cast %39 : vector<1x1xf32> to vector<1x1xf32>
      %46 = vector.broadcast %45 : vector<1x1xf32> to vector<1x128xf32>
      %c0_30 = arith.constant 0 : index
      %c0_31 = arith.constant 0 : index
      %c1 = arith.constant 1 : index
      %c0_32 = arith.constant 0 : index
      %47 = vector.load %arg5[%c0_30, %c0_31, %c1, %c0_32] : memref<1x1x2x128xf32, #tpu.memory_space<vmem>>, vector<1x1x1x128xf32>
      %48 = vector.shape_cast %47 : vector<1x1x1x128xf32> to vector<1x128xf32>
      %49 = vector.shape_cast %46 : vector<1x128xf32> to vector<1x1x1x128xf32>
      tpu.vector_store %arg5[%c0_30, %c0_31, %c1, %c0_32], %49 {strides = array<i32>} : memref<1x1x2x128xf32, #tpu.memory_space<vmem>>, vector<1x1x1x128xf32>,
    } else {
    }
    return
  }
  func.func @transform_0(%arg0: i32, %arg1: i32, %arg2: i32) -> (i32, i32, i32) {
    %c1_i32 = arith.constant 1 : i32
    %0 = arith.muli %arg1, %c1_i32 : i32
    %1 = arith.addi %0, %arg2 : i32
    %c0_i32 = arith.constant 0 : i32
    %c0_i32_0 = arith.constant 0 : i32
    return %arg0, %c0_i32, %1 : i32, i32, i32
  }
  func.func @transform_1(%arg0: i32, %arg1: i32, %arg2: i32) -> (i32, i32, i32) {
    %c1_i32 = arith.constant 1 : i32
    %0 = arith.muli %arg1, %c1_i32 : i32
    %1 = arith.addi %0, %arg2 : i32
    %c0_i32 = arith.constant 0 : i32
    %c0_i32_0 = arith.constant 0 : i32
    return %arg0, %c0_i32, %1 : i32, i32, i32
  }
  func.func @transform_2(%arg0: i32, %arg1: i32, %arg2: i32) -> (i32, i32, i32, i32) {
    %c0_i32 = arith.constant 0 : i32
    %c0_i32_0 = arith.constant 0 : i32
    %c0_i32_1 = arith.constant 0 : i32
    return %arg0, %arg1, %c0_i32, %c0_i32_0 : i32, i32, i32, i32
  }
}

</mosaic_0001>

<llo_original>
// kernel: _dice_loss_impl.1
$region0: #{_dice_loss_impl.1}
  #allocation0 [shape = 'u32[]', space=smem, size = 0x4, offset = 0x4, fixed_abs, tag = 'smem constant byte address 0x4 - core index']
  #allocation1 [shape = 'u32[144,128]{1,0:T(1,128)}', space=vmem, size = 0x12000, scoped, tag = 'internal scratch']
  #allocation2 [shape = 'f32[4,1]{1,0:T(4,128)}', space=vmem, size = 0x800, scoped, tag = 'scratch operand']
  #allocation3 [shape = 'f32[4,1]{1,0:T(4,128)}', space=vmem, size = 0x800, scoped, tag = 'scratch operand']
  %s0 = inlined_call_operand.vmem [shape: bf16[2,4,256], index: 0, kind: input, shape index: {}]
  %s1 = inlined_call_operand.vmem [shape: s32[2,1,256], index: 1, kind: input, shape index: {}]
  %s2 = inlined_call_operand.vmem [shape: f32[2,2,2,128], index: 2, kind: output, shape index: {}]
  %s3 = sld [smem:[#allocation0]]
  $region49: #{_dice_loss_impl.1} parent=0
    _
  %s5 = ssub.s32 1, %s3
  %s6 = scalar_select 0, %s5, %s3
  loop: start=0, step=1, limit=6
  $region2: #{_dice_loss_impl.1} parent=0 // loop_pre_header
    _
  $region3: #{_dice_loss_impl.1} parent=0 // loop_header
    %s8 = sphi 0, %s12
    %p9 = scmp.ge.s32.totalorder %s8, 6
    %s15 = sphi 0, %s34
    %s16 = sphi 0, %s30
    %s17 = sphi 0, %s26
    %s18 = sphi 0, %s15
    %s19 = sphi 0, %s16
    %s20 = sphi 0, %s17
    %s21 = sphi 0, %s18
    %s22 = sphi 0, %s19
    %s23 = sphi 0, %s20
    %s41 = sphi 0, %s43
    %s44 = sphi 0, %s41
    %s45 = sphi 0, %s44
    %s61 = sphi 0, %s45
    %s71 = sphi 0, %s73
    %s74 = sphi 0, %s71
    %s75 = sphi 0, %s74
    %s91 = sphi 0, %s75
    %s99 = sphi 0, %s101
    %s102 = sphi 0, %s99
    %s103 = sphi 0, %s102
    %s119 = sphi 0, %s103
  $region4: #{_dice_loss_impl.1} parent=0 // loop_header_branch
    %11 = sbr.rel (%p9) target = $region8
  $region5: #{_dice_loss_impl.1} parent=0 // loop_body
    %s13 = ssub.s32 %s8, 1
    %s14 = ssub.s32 %s8, 2
    %s24 = sadd.s32 1, %s17
    %p25 = scmp.ge.s32.totalorder %s24, 1
    %s26 = scalar_select %p25, 0, %s24
    %s27 = sadd.s32 1, %s16
    %s28 = scalar_select %p25, %s27, %s16
    %p29 = scmp.ge.s32.totalorder %s28, 2
    %s30 = scalar_select %p29, 0, %s28
    %s31 = sadd.s32 1, %s15
    %s32 = scalar_select %p29, %s31, %s15
    %p33 = scmp.ge.s32.totalorder %s32, 2
    %s34 = scalar_select %p33, 0, %s32
    %s35 = sadd.s32 %s16, %s17
    %s36 = sadd.s32 %s30, %s26
    %s37 = ssub.s32 %s15, %s34
    %s38 = ssub.s32 %s35, %s36
    %s39 = sor.u32 %s37, %s38
    %p40 = scmp.eq.s32.totalorder %s39, 0
    %s42 = sadd.s32 %s41, 1
    %s43 = scalar_select %p40, %s41, %s42
    %p46 = pneg %p40
    %p47 = scmp.eq.s32.totalorder %s8, 3
    %p48 = por %p46, %p47
    %p49 = scmp.ne.s32.totalorder %s41, %s44
    %p50 = scmp.eq.s32.totalorder %s8, 0
    %p51 = por %p49, %p50
    %p52 = scmp.ne.s32.totalorder %s41, %s44
    %p53 = scmp.eq.s32.totalorder %s13, 3
    %p54 = por %p52, %p53
    %p55 = scmp.ne.s32.totalorder %s44, %s45
    %p56 = scmp.eq.s32.totalorder %s13, 0
    %p57 = por %p55, %p56
    %p58 = scmp.ne.s32.totalorder %s44, %s45
    %p59 = scmp.eq.s32.totalorder %s14, 3
    %p60 = por %p58, %p59
    %p62 = scmp.ne.s32.totalorder %s45, %s61
    %p63 = scmp.eq.s32.totalorder %s14, 0
    %p64 = por %p62, %p63
    %s65 = sadd.s32 %s16, %s17
    %s66 = sadd.s32 %s30, %s26
    %s67 = ssub.s32 %s15, %s34
    %s68 = ssub.s32 %s65, %s66
    %s69 = sor.u32 %s67, %s68
    %p70 = scmp.eq.s32.totalorder %s69, 0
    %s72 = sadd.s32 %s71, 1
    %s73 = scalar_select %p70, %s71, %s72
    %p76 = pneg %p70
    %p77 = scmp.eq.s32.totalorder %s8, 3
    %p78 = por %p76, %p77
    %p79 = scmp.ne.s32.totalorder %s71, %s74
    %p80 = scmp.eq.s32.totalorder %s8, 0
    %p81 = por %p79, %p80
    %p82 = scmp.ne.s32.totalorder %s71, %s74
    %p83 = scmp.eq.s32.totalorder %s13, 3
    %p84 = por %p82, %p83
    %p85 = scmp.ne.s32.totalorder %s74, %s75
    %p86 = scmp.eq.s32.totalorder %s13, 0
    %p87 = por %p85, %p86
    %p88 = scmp.ne.s32.totalorder %s74, %s75
    %p89 = scmp.eq.s32.totalorder %s14, 3
    %p90 = por %p88, %p89
    %p92 = scmp.ne.s32.totalorder %s75, %s91
    %p93 = scmp.eq.s32.totalorder %s14, 0
    %p94 = por %p92, %p93
    %s95 = ssub.s32 %s15, %s34
    %s96 = ssub.s32 %s16, %s30
    %s97 = sor.u32 %s95, %s96
    %p98 = scmp.eq.s32.totalorder %s97, 0
    %s100 = sadd.s32 %s99, 1
    %s101 = scalar_select %p98, %s99, %s100
    %p104 = pneg %p98
    %p105 = scmp.eq.s32.totalorder %s8, 3
    %p106 = por %p104, %p105
    %p107 = scmp.ne.s32.totalorder %s99, %s102
    %p108 = scmp.eq.s32.totalorder %s8, 0
    %p109 = por %p107, %p108
    %p110 = scmp.ne.s32.totalorder %s99, %s102
    %p111 = scmp.eq.s32.totalorder %s13, 3
    %p112 = por %p110, %p111
    %p113 = scmp.ne.s32.totalorder %s102, %s103
    %p114 = scmp.eq.s32.totalorder %s13, 0
    %p115 = por %p113, %p114
    %p116 = scmp.ne.s32.totalorder %s102, %s103
    %p117 = scmp.eq.s32.totalorder %s14, 3
    %p118 = por %p116, %p117
    %p120 = scmp.ne.s32.totalorder %s103, %s119
    %p121 = scmp.eq.s32.totalorder %s14, 0
    %p122 = por %p120, %p121
    %p123 = scmp.le.s32.totalorder 1, %s8
    %p124 = scmp.lt.s32.totalorder %s8, 5
    %p125 = pnand %p123, %p124
    %p126 = pneg %p125
    // Predicated region
    $region9: #{_dice_loss_impl.1} parent=5 // pred_check
      _
    $region10: #{_dice_loss_impl.1} parent=5 // pred_check_branch
      %128 = sbr.rel (%p125) target = $region12
    $region11: #{_dice_loss_impl.1} parent=5 // pred_region
      %s129 = ssub.s32 %s8, 1
    $region12: #{_dice_loss_impl.1} parent=5 // pred_fallthru
      _
    %p130 = scmp.lt.s32.totalorder %s8, 4
    // Predicated region
    $region13: #{_dice_loss_impl.1} parent=5 // pred_check
      %p131 = pneg %p130
    $region14: #{_dice_loss_impl.1} parent=5 // pred_check_branch
      %133 = sbr.rel (%p131) target = $region16
    $region15: #{_dice_loss_impl.1} parent=5 // pred_region
      // Predicated region
      $region17: #{_dice_loss_impl.1} parent=15 // pred_check
        %p134 = pneg %p51
      $region18: #{_dice_loss_impl.1} parent=15 // pred_check_branch
        %136 = sbr.rel (%p134) target = $region20
      $region19: #{_dice_loss_impl.1} parent=15 // pred_region
        %s137 = sadd.s32 %s16, %s17
        %p138 = scmp.lt.s32.totalorder %s15, 1
        %s139 = scalar_select %p138, %s15, 1
        %p140 = scmp.lt.s32.totalorder %s137, 1
        %s141 = scalar_select %p140, %s137, 1
        %s142 = smul.addr %s139, 2
        %s143 = sadd.s32 %s141, %s142
        %s144 = smul.addr %s143, 2
        %s145 = scalar_lea.vmem %s0, %s144
        %s146 = sadd.s32 %s16, %s17
      $region20: #{_dice_loss_impl.1} parent=15 // pred_fallthru
        _
      // Predicated region
      $region21: #{_dice_loss_impl.1} parent=15 // pred_check
        %p147 = pneg %p81
      $region22: #{_dice_loss_impl.1} parent=15 // pred_check_branch
        %149 = sbr.rel (%p147) target = $region24
      $region23: #{_dice_loss_impl.1} parent=15 // pred_region
        %s150 = sadd.s32 %s16, %s17
        %p151 = scmp.lt.s32.totalorder %s15, 1
        %s152 = scalar_select %p151, %s15, 1
        %p153 = scmp.lt.s32.totalorder %s150, 1
        %s154 = scalar_select %p153, %s150, 1
        %s155 = smul.addr %s152, 2
        %s156 = sadd.s32 %s154, %s155
        %s157 = scalar_lea.vmem %s1, %s156
        %s158 = sadd.s32 %s16, %s17
      $region24: #{_dice_loss_impl.1} parent=15 // pred_fallthru
        _
    $region16: #{_dice_loss_impl.1} parent=5 // pred_fallthru
      _
    %p159 = scmp.le.s32.totalorder 1, %s8
    %p160 = scmp.lt.s32.totalorder %s8, 5
    %p161 = pnand %p159, %p160
    %p162 = pneg %p161
    // Predicated region
    $region25: #{_dice_loss_impl.1} parent=5 // pred_check
      _
    $region26: #{_dice_loss_impl.1} parent=5 // pred_check_branch
      %164 = sbr.rel (%p161) target = $region28
    $region27: #{_dice_loss_impl.1} parent=5 // pred_region
      %s165 = ssub.s32 %s8, 1
      %s166 = sadd.s32 %s19, %s20
      %p167 = scmp.lt.s32.totalorder %s18, 1
      %s168 = scalar_select %p167, %s18, 1
      %p169 = scmp.lt.s32.totalorder %s166, 1
      %s170 = scalar_select %p169, %s166, 1
      %s171 = smul.addr %s168, 2
      %s172 = sadd.s32 %s170, %s171
      %s173 = smul.addr %s172, 2
      %s174 = scalar_lea.vmem %s0, %s173
      %p175 = pneg %p57
      %p176 = pneg %p54
      %s177 = sadd.s32 %s19, %s20
      %p178 = scmp.lt.s32.totalorder %s18, 1
      %s179 = scalar_select %p178, %s18, 1
      %p180 = scmp.lt.s32.totalorder %s177, 1
      %s181 = scalar_select %p180, %s177, 1
      %s182 = smul.addr %s179, 2
      %s183 = sadd.s32 %s181, %s182
      %s184 = scalar_lea.vmem %s1, %s183
      %p185 = pneg %p87
      %p186 = pneg %p84
      %p187 = pneg %p115
      %p188 = pneg %p112
      %p189 = scmp.lt.s32.totalorder %s18, 1
      %s190 = scalar_select %p189, %s18, 1
      %p191 = scmp.lt.s32.totalorder %s19, 1
      %s192 = scalar_select %p191, %s19, 1
      %s193 = smul.addr %s190, 2
      %s194 = sadd.s32 %s192, %s193
      %s195 = smul.addr %s194, 2
      %s196 = scalar_lea.vmem %s2, %s195
      %s197 = sadd.s32 %s19, %s20
      %p198 = scmp.lt.s32.totalorder %s18, 1
      %s199 = scalar_select %p198, %s18, 1
      %p200 = scmp.lt.s32.totalorder %s197, 1
      %s201 = scalar_select %p200, %s197, 1
      %s202 = smul.addr %s199, 2
      %s203 = sadd.s32 %s201, %s202
      %s204 = smul.addr %s203, 2
      %s205 = scalar_lea.vmem %s0, %s204
      %s206 = sadd.s32 %s19, %s20
      %s207 = sadd.s32 %s19, %s20
      %p208 = scmp.lt.s32.totalorder %s18, 1
      %s209 = scalar_select %p208, %s18, 1
      %p210 = scmp.lt.s32.totalorder %s207, 1
      %s211 = scalar_select %p210, %s207, 1
      %s212 = smul.addr %s209, 2
      %s213 = sadd.s32 %s211, %s212
      %s214 = scalar_lea.vmem %s1, %s213
      %s215 = sadd.s32 %s19, %s20
      %p216 = scmp.lt.s32.totalorder %s18, 1
      %s217 = scalar_select %p216, %s18, 1
      %p218 = scmp.lt.s32.totalorder %s19, 1
      %s219 = scalar_select %p218, %s19, 1
      %s220 = smul.addr %s217, 2
      %s221 = sadd.s32 %s219, %s220
      %s222 = smul.addr %s221, 2
      %s223 = scalar_lea.vmem %s2, %s222
      %p224 = scmp.eq.s32.totalorder %s20, 0
      // Predicated region
      $region29: #{_dice_loss_impl.1} parent=27 // pred_check
        %p225 = pneg %p224
      $region30: #{_dice_loss_impl.1} parent=27 // pred_check_branch
        %227 = sbr.rel (%p225) target = $region32
      $region31: #{_dice_loss_impl.1} parent=27 // pred_region
        %vm228 = vcmask 3072
        %229 = vst.msk [vmem:[#allocation2] sm:$0xf] %vm228, 0.0
        %230 = vst.msk [vmem:[#allocation3] sm:$0xf] %vm228, 0.0
      $region32: #{_dice_loss_impl.1} parent=27 // pred_fallthru
        _
      %v231 = vld [vmem:[%s205] sm:$0x3]
      %v232 = vunpack.c.l.bf16 %v231
      %v233 = vld [vmem:[%s214] sm:$0x1]
      %v234 = vxor.u32 %v232, 2147483648
      %v235 = vmul.f32 %v234, 1.442695
      %v236 = vpow.pop %v235
      %v237 = vadd.f32 %v236, 1.0
      %v238 = vrcp.pop %v237
      %v239 = vmul.f32 1.0, %v238
      %v240 = vlaneseq
      %v241 = vshrl.u32 %v240, 7
      %v242 = vlaneseq
      %v243 = vshrl.u32 %v242, 7
      %v244 = vsub.s32 0, %v243
      %v245 = vrot.slane %v233, %v244
      %vm246 = vcmp.eq.s32.totalorder %v241, %v245
      %v247 = vld [vmem:[#allocation2] sm:$0xf]
      %v248 = vsel %vm246, %v239, 0.0
      %vm249 = vcmask 1043456
      %v250 = vsel %vm249, %v248, 0.0
      %251 = vadd.xlane.f32.xlu0 %v250
      %v252 = vpop.xlane.xlu0 %251
      %v253 = vadd.f32 %v247, %v252
      %vm254 = vcmask 3072
      %255 = vst.msk [vmem:[#allocation2] sm:$0xf] %vm254, %v253
      %v256 = vld [vmem:[#allocation3] sm:$0xf]
      %v257 = vadd.f32 %v239, 1.0
      %v258 = vsel %vm246, %v257, %v239
      %v259 = vsel %vm249, %v258, 0.0
      %260 = vadd.xlane.f32.xlu0 %v259
      %v261 = vpop.xlane.xlu0 %260
      %v262 = vadd.f32 %v256, %v261
      %263 = vst.msk [vmem:[#allocation3] sm:$0xf] %vm254, %v262
      // Predicated region
      $region33: #{_dice_loss_impl.1} parent=27 // pred_check
        %p264 = pneg %p224
      $region34: #{_dice_loss_impl.1} parent=27 // pred_check_branch
        %266 = sbr.rel (%p264) target = $region36
      $region35: #{_dice_loss_impl.1} parent=27 // pred_region
        %v267 = vld [vmem:[#allocation2] sm:$0xf]
        %v268 = vld [vmem:[#allocation3] sm:$0xf]
        %v269 = vsel %vm254, %v267, 0.0
        %v270 = vrot.slane %v269, 4
        %v271 = vadd.f32 %v269, %v270
        %v272 = vrot.slane %v271, 2
        %v273 = vadd.f32 %v271, %v272
        %v274 = vrot.slane %v273, 1
        %v275 = vadd.f32 %v273, %v274
        %v276 = vsel %vm254, %v268, 0.0
        %v277 = vrot.slane %v276, 4
        %v278 = vadd.f32 %v276, %v277
        %v279 = vrot.slane %v278, 2
        %v280 = vadd.f32 %v278, %v279
        %v281 = vrot.slane %v280, 1
        %v282 = vadd.f32 %v280, %v281
        %284 = vset.pattern.permute.xlu0 0
        %285 = vperm.xlu0 %284, %v275
        %v286 = vpop.permute.xlu0 %285
        %288 = vst [vmem:[%s223] sm:$0x1] %v286
        %290 = vset.pattern.permute.xlu0 0
        %291 = vperm.xlu0 %290, %v282
        %v292 = vpop.permute.xlu0 %291
        %294 = vst [vmem:[%s223 + $0x1] sm:$0x1] %v292
      $region36: #{_dice_loss_impl.1} parent=27 // pred_fallthru
        _
      %p295 = scmp.lt.s32.totalorder %s18, 1
      %s296 = scalar_select %p295, %s18, 1
      %p297 = scmp.lt.s32.totalorder %s19, 1
      %s298 = scalar_select %p297, %s19, 1
      %s299 = smul.addr %s296, 2
      %s300 = sadd.s32 %s298, %s299
      %s301 = smul.addr %s300, 2
      %s302 = scalar_lea.vmem %s2, %s301
      // Predicated region
      $region37: #{_dice_loss_impl.1} parent=27 // pred_check
        %p303 = pneg %p112
      $region38: #{_dice_loss_impl.1} parent=27 // pred_check_branch
        %305 = sbr.rel (%p303) target = $region40
      $region39: #{_dice_loss_impl.1} parent=27 // pred_region
        _
      $region40: #{_dice_loss_impl.1} parent=27 // pred_fallthru
        _
    $region28: #{_dice_loss_impl.1} parent=5 // pred_fallthru
      _
    %p306 = scmp.le.s32.totalorder 2, %s8
    // Predicated region
    $region41: #{_dice_loss_impl.1} parent=5 // pred_check
      %p307 = pneg %p306
    $region42: #{_dice_loss_impl.1} parent=5 // pred_check_branch
      %309 = sbr.rel (%p307) target = $region44
    $region43: #{_dice_loss_impl.1} parent=5 // pred_region
      %s310 = ssub.s32 %s8, 2
      // Predicated region
      $region45: #{_dice_loss_impl.1} parent=43 // pred_check
        %p311 = pneg %p118
      $region46: #{_dice_loss_impl.1} parent=43 // pred_check_branch
        %313 = sbr.rel (%p311) target = $region48
      $region47: #{_dice_loss_impl.1} parent=43 // pred_region
        %p314 = scmp.lt.s32.totalorder %s21, 1
        %s315 = scalar_select %p314, %s21, 1
        %p316 = scmp.lt.s32.totalorder %s22, 1
        %s317 = scalar_select %p316, %s22, 1
        %s318 = smul.addr %s315, 2
        %s319 = sadd.s32 %s317, %s318
        %s320 = smul.addr %s319, 2
        %s321 = scalar_lea.vmem %s2, %s320
      $region48: #{_dice_loss_impl.1} parent=43 // pred_fallthru
        _
    $region44: #{_dice_loss_impl.1} parent=5 // pred_fallthru
      _
  $region6: #{_dice_loss_impl.1} parent=0 // loop_footer
    %s12 = sadd.s32 1, %s8
  $region7: #{_dice_loss_impl.1} parent=0 // loop_footer_branch
    %7 = sbr.rel target = $region3
  $region8: #{_dice_loss_impl.1} parent=0 // loop_exit
    _

</llo_original>
